<compile_context>
chip_gen: v6e
topology: v6e:2x2x1
jax: 0.10.0
libtpu: 0.0.40
codegen_flags: <defaults>
</compile_context>

<pallas_src>
import math

import jax
import jax.numpy as jnp
import numpy as np
from jax.experimental import pallas as pl
from jax.experimental.pallas import tpu as pltpu

# ----- model constants -------------------------------------------------------
CUTOFF = 0.4            # neighbor-graph radius (nm)
CUTOFF2 = CUTOFF * CUTOFF
OFFSET = 0.009          # GB radius offset (nm)
KE = 138.935458         # Coulomb constant, kJ nm / (mol e^2)
EPS_SOLVENT = 78.5
KEFF = KE * (1.0 - 1.0 / EPS_SOLVENT)
NECK_A = 1.09511284
NECK_B = 1.907992938
NECK_C = 2.50798245


def _born(I, rho, r):
    """Born radius B and dB/dI from the descreening integral I (GB-Neck2 style)."""
    psi = I * rho
    t = NECK_A * psi - NECK_B * psi * psi + NECK_C * psi * psi * psi
    th = jnp.tanh(t)
    inv_b = 1.0 / rho - th / r
    b = 1.0 / inv_b
    dt_dI = (NECK_A - 2.0 * NECK_B * psi + 3.0 * NECK_C * psi * psi) * rho
    bp = b * b * (1.0 - th * th) / r * dt_dI
    return b, bp


# ----- in-kernel helpers ------------------------------------------------------
def _recip_exact(x):
    """EUP approximate reciprocal + one Newton step (~f32 accurate, no divide)."""
    r = pl.reciprocal(x, approx=True)
    return r * (2.0 - x * r)


def _pair_d2(pos_blk, pos_cn):
    """Exact pairwise squared distances (3-term VPU expansion, f32)."""
    f32 = jnp.float32
    tm = pos_blk.shape[0]
    tn = pos_cn.shape[1]
    d2 = jnp.zeros((tm, tn), f32)
    for k in range(3):                     # only coordinate rows/cols 0..2 are real
        diff = pos_blk[:, k:k + 1] - pos_cn[k:k + 1, :]
        d2 = d2 + diff * diff
    return d2


def _pair_mask(d2, bat_i, bat_j):
    """Neighbor mask.  d2 == 0 identifies the self pair *exactly* (pos_cn is a
    transposed copy of the same array), so no iota-based i==j test is needed.
    Batch ids travel as f32; == is exact for integer ids < 2^24."""
    return ((bat_i == bat_j) & (d2 < CUTOFF2) & (d2 > 0.0)).astype(jnp.float32)


# ----- pass 1: descreening integral I_i --------------------------------------
def _descreen_kernel(pos_blk_ref, pos_cn_ref, row_ref, col_ref, i_ref):
    @pl.when(pl.program_id(1) == 0)
    def _():
        i_ref[...] = jnp.zeros_like(i_ref)

    sr_j = row_ref[0:1, :]
    srsq_j = row_ref[1:2, :]
    bat_j = row_ref[2:3, :]
    bat_i = col_ref[:, 0:1]

    d2 = _pair_d2(pos_blk_ref[...], pos_cn_ref[...])
    mf = _pair_mask(d2, bat_i, bat_j)
    h = sr_j * _recip_exact(d2 + srsq_j)             # energy path -> refined recip
    i_ref[...] += jnp.sum(mf * h, axis=1, keepdims=True)


# ----- pass 2: pair energies, dE/dB_i, and the two own-atom force accumulators
def _energies_kernel(pos_blk_ref, pos_cn_ref, pos_all_ref, row_ref, col_ref,
                     e_ref, c_ref, fa_ref, fb_ref):
    f32 = jnp.float32

    @pl.when(pl.program_id(1) == 0)
    def _():
        e_ref[...] = jnp.zeros_like(e_ref)
        c_ref[...] = jnp.zeros_like(c_ref)
        fa_ref[...] = jnp.zeros_like(fa_ref)
        fb_ref[...] = jnp.zeros_like(fb_ref)

    q_j = row_ref[0:1, :]                 # charge * sqrt(KEFF)
    b_j = row_ref[1:2, :]                 # Born radius
    invb_j = row_ref[2:3, :]              # 1 / B_j
    sr_j = row_ref[3:4, :]                # scaled (offset) radius
    srsq_j = row_ref[4:5, :]              # sr_j^2
    bat_j = row_ref[5:6, :]

    q_i = col_ref[:, 0:1]                 # charge * sqrt(KEFF)
    b_i = col_ref[:, 1:2]
    qib_i = col_ref[:, 2:3]               # 0.25 / B_i
    bat_i = col_ref[:, 3:4]

    pos_blk = pos_blk_ref[...]
    d2 = _pair_d2(pos_blk, pos_cn_ref[...])
    mf = _pair_mask(d2, bat_i, bat_j)

    # GB pair energy  P_ij = -keff q_i q_j / f,  f^2 = d2 + B_i B_j exp(-d2/(4 B_i B_j))
    u = b_i * b_j
    xgb = d2 * (qib_i * invb_j)                      # = d2 / (4 B_i B_j), no per-pair recip
    g = jnp.exp(-xgb)
    f2 = d2 + u * g
    inv_f = jax.lax.rsqrt(f2)
    inv_f = inv_f * (1.5 - (0.5 * f2) * (inv_f * inv_f))   # Newton step: energy path

    pm = (mf * (q_i * q_j)) * inv_f                  # = mf * (-P_ij)
    e_ref[...] += jnp.sum(pm, axis=1, keepdims=True)        # wrapper applies -0.5

    w = pm * (inv_f * inv_f)                         # mf * (-P) / f^2
    wg = w * g
    # dP_ij/dB_i = (-P)/f^2 * 0.5 * g * (1 + xgb) * B_j   (0.5 applied in wrapper)
    c_ref[...] += jnp.sum((wg * (1.0 + xgb)) * b_j, axis=1, keepdims=True)

    # force terms that only need this block's own atoms (the distance cancels
    # analytically in  (dP/dd)/d  and  (dh/dd)/d):
    coef_a = w - 0.25 * wg                           # mf * (dP/dd)/d
    inv_den = pl.reciprocal(d2 + srsq_j, approx=True)        # force path: approx ok
    coef_b = (mf * sr_j) * (inv_den * inv_den)       # wrapper scales by (-2 c_i bp_i)

    # F_i = sum_j coef_ij (pos_j - pos_i): one MXU matmul each; column 3 of the
    # padded coords is 1.0, so rowsum(coef) is column 3 of the same result.
    pos_all = pos_all_ref[...]                       # (TN, 8)
    ra = jnp.dot(coef_a, pos_all, preferred_element_type=f32)
    fa_ref[...] += ra - ra[:, 3:4] * pos_blk
    rb = jnp.dot(coef_b, pos_all, preferred_element_type=f32)
    fb_ref[...] += rb - rb[:, 3:4] * pos_blk


# ----- pass 3: remaining force term, needs c_j of the partner atoms ----------
def _force_partner_kernel(pos_blk_ref, pos_cn_ref, pos_all_ref, row_ref, col_ref,
                          f_ref):
    f32 = jnp.float32

    @pl.when(pl.program_id(1) == 0)
    def _():
        f_ref[...] = jnp.zeros_like(f_ref)

    cbp2_j = row_ref[0:1, :]              # -2 c_j bp_j (premultiplied in wrapper)
    bat_j = row_ref[1:2, :]
    sr_i = col_ref[:, 0:1]
    srsq_i = col_ref[:, 1:2]
    bat_i = col_ref[:, 2:3]

    pos_blk = pos_blk_ref[...]
    d2 = _pair_d2(pos_blk, pos_cn_ref[...])
    mf = _pair_mask(d2, bat_i, bat_j)

    #   -2 c_j bp_j * dh(d, sr_i)/dd / d   (transposed orientation of the pass-2 term)
    inv_den = pl.reciprocal(d2 + srsq_i, approx=True)
    coef = ((mf * sr_i) * (inv_den * inv_den)) * cbp2_j

    r = jnp.dot(coef, pos_all_ref[...], preferred_element_type=f32)
    f_ref[...] += r - r[:, 3:4] * pos_blk


# ----- tiling helper ----------------------------------------------------------
def _tiles(N, tm, tn):
    """Padded atom count Np and (row, column) tile sizes obeying the (8,128) rules."""
    if N <= tm and N <= tn:                # single tile: full-extent blocks
        Np = max(8, ((N + 7) // 8) * 8)
        return Np, Np, Np
    TM = max(128, (tm // 128) * 128)       # row tile: multiple of 128
    Np = ((N + TM - 1) // TM) * TM
    cand = min((tn // 128) * 128, Np)
    TN = 128
    while cand >= 128:                     # largest 128-multiple <= tn dividing Np
        if Np % cand == 0:
            TN = cand
            break
        cand -= 128
    return Np, TM, TN


# ----- wrapper ----------------------------------------------------------------
def gbneck_forward(pos, gbparameters, batch, n_batch, tm=256, tn=512):
    """pos: (N,3) f32; gbparameters: (atoms_per_mol, 3) [charge, radius, scale];
    batch: (N,) int32. Returns (energy (n_batch,1), forces (N,3), energies (N,1))."""
    f32 = jnp.float32
    N = pos.shape[0]
    pos = pos.astype(f32)
    batch = batch.astype(jnp.int32)

    x = jnp.tile(gbparameters.astype(f32), (n_batch, 1))   # == repeat(max(batch)+1, 1)
    q, r, s = x[:, 0], x[:, 1], x[:, 2]
    rho = r - OFFSET
    sr = s * rho

    # per-batch centering: intra-batch distances unchanged, cross-batch pairs are
    # masked by batch id; bounds |pos| so the MXU force contraction stays robust.
    onehot = (batch[:, None] == jnp.arange(n_batch)[None, :]).astype(f32)   # (N, nb)
    counts = jnp.maximum(onehot.sum(axis=0), 1.0)
    cen = (onehot.T @ pos) / counts[:, None]
    posc = pos - onehot @ cen

    Np, TM, TN = _tiles(N, tm, tn)
    padn = Np - N

    def padv(v, val=0.0):
        v = v.astype(f32)
        if padn == 0:
            return v
        return jnp.concatenate([v, jnp.full((padn,), val, f32)])

    sqrt_keff = float(math.sqrt(KEFF))
    q_p = padv(q)                                        # pad atoms: zero charge
    q_s = q_p * sqrt_keff                                # fold KEFF into the charges
    rho_p = padv(rho, 0.1)
    r_p = padv(r, 0.1)
    sr_p = padv(sr, 0.1)
    srsq_p = sr_p * sr_p
    if padn:
        bat_p = jnp.concatenate([batch.astype(f32), -1.0 - jnp.arange(padn, dtype=f32)])
    else:
        bat_p = batch.astype(f32)

    # coords padded to 8 lanes; column 3 is all ones -> MXU rowsum trick.
    pos8 = jnp.zeros((Np, 8), f32).at[:N, :3].set(posc).at[:, 3].set(1.0)
    pos8_cn = pos8.T                                     # (8, Np); only rows 0..2 read

    grid = (Np // TM, Np // TN)
    cparams = pltpu.CompilerParams(dimension_semantics=("parallel", "arbitrary"))

    pos_blk_spec = pl.BlockSpec((TM, 8), lambda i, j: (i, 0))
    pos_cn_spec = pl.BlockSpec((8, TN), lambda i, j: (0, j))
    pos_all_spec = pl.BlockSpec((TN, 8), lambda i, j: (j, 0))
    row_spec = lambda k: pl.BlockSpec((k, TN), lambda i, j: (0, j))
    col_spec = lambda k: pl.BlockSpec((TM, k), lambda i, j: (i, 0))
    vec_out = pl.BlockSpec((TM, 1), lambda i, j: (i, 0))
    force_out = pl.BlockSpec((TM, 8), lambda i, j: (i, 0))

    # ---- pass 1: descreening integral I_i -----------------------------------
    rowA = jnp.stack([sr_p, srsq_p, bat_p], axis=0)      # (3, Np)
    colA = bat_p[:, None]                                # (Np, 1)
    I_raw = pl.pallas_call(
        _descreen_kernel, grid=grid,
        in_specs=[pos_blk_spec, pos_cn_spec, row_spec(3), col_spec(1)],
        out_specs=vec_out,
        out_shape=jax.ShapeDtypeStruct((Np, 1), f32),
        compiler_params=cparams,
    )(pos8, pos8_cn, rowA, colA)

    # O(N) glue: Born radii and per-atom self terms / features
    born, bp = _born(I_raw[:, 0], rho_p, r_p)
    invb = 1.0 / born
    e_self = -0.5 * KEFF * q_p * q_p * invb
    c_self = 0.5 * KEFF * q_p * q_p * invb * invb

    # ---- pass 2: energies, c_i = dE/dB_i, own-atom force accumulators -------
    rowB = jnp.stack([q_s, born, invb, sr_p, srsq_p, bat_p], axis=0)     # (6, Np)
    colB = jnp.stack([q_s, born, 0.25 * invb, bat_p], axis=1)            # (Np, 4)
    e_pair, c_pair, fa, fb = pl.pallas_call(
        _energies_kernel, grid=grid,
        in_specs=[pos_blk_spec, pos_cn_spec, pos_all_spec, row_spec(6), col_spec(4)],
        out_specs=[vec_out, vec_out, force_out, force_out],
        out_shape=[jax.ShapeDtypeStruct((Np, 1), f32),
                   jax.ShapeDtypeStruct((Np, 1), f32),
                   jax.ShapeDtypeStruct((Np, 8), f32),
                   jax.ShapeDtypeStruct((Np, 8), f32)],
        compiler_params=cparams,
    )(pos8, pos8_cn, pos8, rowB, colB)

    energies_p = e_self - 0.5 * e_pair[:, 0]             # (Np,)
    c = c_self + 0.5 * c_pair[:, 0]                      # dE/dB
    m2 = -2.0 * c * bp                                   # -2 c_i bp_i  (O(N))

    # ---- pass 3: partner (c_j) force term -----------------------------------
    rowC = jnp.stack([m2, bat_p], axis=0)                # (2, Np)
    colC = jnp.stack([sr_p, srsq_p, bat_p], axis=1)      # (Np, 3)
    fc = pl.pallas_call(
        _force_partner_kernel, grid=grid,
        in_specs=[pos_blk_spec, pos_cn_spec, pos_all_spec, row_spec(2), col_spec(3)],
        out_specs=force_out,
        out_shape=jax.ShapeDtypeStruct((Np, 8), f32),
        compiler_params=cparams,
    )(pos8, pos8_cn, pos8, rowC, colC)

    forces = (fa + m2[:, None] * fb + fc)[:N, :3]        # (N, 3)
    energies_atom = energies_p[:N, None]                 # (N, 1)
    energy = onehot.T @ energies_atom                    # (n_batch, 1)
    return energy, forces, energies_atom


# ----- pure-JAX reference (same math; forces via autodiff) for validation ----
def _reference_atom_energies(pos, q, rho, sr, r, batch):
    d2 = jnp.sum((pos[:, None, :] - pos[None, :, :]) ** 2, axis=-1)
    n = pos.shape[0]
    idx = jnp.arange(n)
    mask = (idx[:, None] != idx[None, :]) & (batch[:, None] == batch[None, :]) & (d2 < CUTOFF2)
    mf = mask.astype(jnp.float32)
    i_int = jnp.sum(mf * (sr[None, :] / (d2 + sr[None, :] ** 2)), axis=1)
    bv, _ = _born(i_int, rho, r)
    u = bv[:, None] * bv[None, :]
    g = jnp.exp(-d2 / (4.0 * u))
    f = jnp.sqrt(d2 + u * g)
    p = -KEFF * q[:, None] * q[None, :] / f
    return -0.5 * KEFF * q * q / bv + 0.5 * jnp.sum(mf * p, axis=0)


if __name__ == "__main__":
    key = jax.random.PRNGKey(0)
    atoms_per_mol = 32
    n_batch = 2
    N = atoms_per_mol * n_batch

    k1, k2, k3, k4 = jax.random.split(key, 4)
    # Deterministic synthetic GBNeck parameters: [charge, GB radius (nm), screen scale]
    charge = jax.random.uniform(k1, (atoms_per_mol, 1), minval=-0.5, maxval=0.5)
    radius = jax.random.uniform(k2, (atoms_per_mol, 1), minval=0.12, maxval=0.20)
    scale = jax.random.uniform(k3, (atoms_per_mol, 1), minval=0.70, maxval=0.90)
    gbparameters = jnp.concatenate([charge, radius, scale], axis=1).astype(jnp.float32)

    # Two molecules; batch mask forbids cross-batch edges (spatial shift kept).
    pos_mol = jax.random.uniform(k4, (n_batch, atoms_per_mol, 3), minval=0.0, maxval=0.6)
    shift = jnp.arange(n_batch, dtype=jnp.float32)[:, None, None] * 2.0
    pos = (pos_mol + shift).reshape(N, 3).astype(jnp.float32)
    batch = jnp.repeat(jnp.arange(n_batch, dtype=jnp.int32), atoms_per_mol)

    energy, forces, energies_atom = gbneck_forward(pos, gbparameters, batch, n_batch)
    jax.block_until_ready((energy, forces, energies_atom))

    # Validate energies and analytic in-kernel forces against an autodiff reference.
    x = jnp.tile(gbparameters, (n_batch, 1))
    q, r, s = x[:, 0], x[:, 1], x[:, 2]
    rho, sr = r - OFFSET, s * (r - OFFSET)
    e_ref = _reference_atom_energies(pos, q, rho, sr, r, batch)
    f_ref = -jax.grad(lambda p_: jnp.sum(_reference_atom_energies(p_, q, rho, sr, r, batch)))(pos)
    np.testing.assert_allclose(np.asarray(energies_atom[:, 0]), np.asarray(e_ref),
                               rtol=1e-3, atol=1e-3)
    np.testing.assert_allclose(np.asarray(forces), np.asarray(f_ref), rtol=5e-2, atol=1e-1)

    assert energy.shape == (n_batch, 1) and forces.shape == (N, 3)
    print("KERNEL_OK")
</pallas_src>

<mosaic_0001>
module attributes {stable_mosaic.version = 11 : i64} {
  func.func @_descreen_kernel(%arg0: i32, %arg1: i32, %arg2: memref<64x8xf32, #tpu.memory_space<vmem>>, %arg3: memref<8x64xf32, #tpu.memory_space<vmem>>, %arg4: memref<3x64xf32, #tpu.memory_space<vmem>>, %arg5: memref<64x1xf32, #tpu.memory_space<vmem>>, %arg6: memref<64x1xf32, #tpu.memory_space<vmem>>) attributes {dimension_semantics = [#tpu.dimension_semantics<parallel>, #tpu.dimension_semantics<arbitrary>], iteration_bounds = array<i64: 1, 1>, scalar_prefetch = 0 : i64, scratch_operands = 0 : i64, tpu.core_type = #tpu.core_type<tc>, window_params = [{transform_indices = @transform_0, window_bounds = array<i64: 64, 8>}, {transform_indices = @transform_1, window_bounds = array<i64: 8, 64>}, {transform_indices = @transform_2, window_bounds = array<i64: 3, 64>}, {transform_indices = @transform_3, window_bounds = array<i64: 64, 1>}, {transform_indices = @transform_4, window_bounds = array<i64: 64, 1>}]} {
    %c0_i32 = arith.constant 0 : i32
    %0 = arith.cmpi eq, %arg1, %c0_i32 : i32
    %1 = arith.extui %0 : i1 to i32
    %c0_i32_0 = arith.constant 0 : i32
    %2 = arith.cmpi ne, %1, %c0_i32_0 : i32
    scf.if %2 {
      %cst_18 = arith.constant 0.000000e+00 : f32
      %57 = vector.broadcast %cst_18 : f32 to vector<64x1xf32>
      %c0_19 = arith.constant 0 : index
      %c0_20 = arith.constant 0 : index
      %58 = vector.load %arg6[%c0_19, %c0_20] : memref<64x1xf32, #tpu.memory_space<vmem>>, vector<64x1xf32>
      tpu.vector_store %arg6[%c0_19, %c0_20], %57 {strides = array<i32>} : memref<64x1xf32, #tpu.memory_space<vmem>>, vector<64x1xf32>,
    } else {
    }
    %c0 = arith.constant 0 : index
    %c0_1 = arith.constant 0 : index
    %3 = vector.load %arg4[%c0, %c0_1] : memref<3x64xf32, #tpu.memory_space<vmem>>, vector<1x64xf32>
    %c1 = arith.constant 1 : index
    %c0_2 = arith.constant 0 : index
    %4 = vector.load %arg4[%c1, %c0_2] : memref<3x64xf32, #tpu.memory_space<vmem>>, vector<1x64xf32>
    %c2 = arith.constant 2 : index
    %c0_3 = arith.constant 0 : index
    %5 = vector.load %arg4[%c2, %c0_3] : memref<3x64xf32, #tpu.memory_space<vmem>>, vector<1x64xf32>
    %c0_4 = arith.constant 0 : index
    %c0_5 = arith.constant 0 : index
    %6 = vector.load %arg5[%c0_4, %c0_5] : memref<64x1xf32, #tpu.memory_space<vmem>>, vector<64x1xf32>
    %c0_6 = arith.constant 0 : index
    %c0_7 = arith.constant 0 : index
    %7 = vector.load %arg2[%c0_6, %c0_7] : memref<64x8xf32, #tpu.memory_space<vmem>>, vector<64x8xf32>
    %c0_8 = arith.constant 0 : index
    %c0_9 = arith.constant 0 : index
    %8 = vector.load %arg3[%c0_8, %c0_9] : memref<8x64xf32, #tpu.memory_space<vmem>>, vector<8x64xf32>
    %cst = arith.constant 0.000000e+00 : f32
    %9 = vector.broadcast %cst : f32 to vector<64x64xf32>
    %10 = vector.extract_strided_slice %7 {offsets = [0, 0], sizes = [64, 1], strides = [1, 1]} : vector<64x8xf32> to vector<64x1xf32>
    %11 = vector.extract_strided_slice %8 {offsets = [0, 0], sizes = [1, 64], strides = [1, 1]} : vector<8x64xf32> to vector<1x64xf32>
    %12 = vector.broadcast %10 : vector<64x1xf32> to vector<64x64xf32>
    %13 = vector.broadcast %11 : vector<1x64xf32> to vector<64x64xf32>
    %14 = arith.subf %12, %13 : vector<64x64xf32>
    %15 = arith.mulf %14, %14 : vector<64x64xf32>
    %16 = arith.addf %9, %15 : vector<64x64xf32>
    %17 = vector.extract_strided_slice %7 {offsets = [0, 1], sizes = [64, 1], strides = [1, 1]} : vector<64x8xf32> to vector<64x1xf32>
    %18 = vector.extract_strided_slice %8 {offsets = [1, 0], sizes = [1, 64], strides = [1, 1]} : vector<8x64xf32> to vector<1x64xf32>
    %19 = vector.broadcast %17 : vector<64x1xf32> to vector<64x64xf32>
    %20 = vector.broadcast %18 : vector<1x64xf32> to vector<64x64xf32>
    %21 = arith.subf %19, %20 : vector<64x64xf32>
    %22 = arith.mulf %21, %21 : vector<64x64xf32>
    %23 = arith.addf %16, %22 : vector<64x64xf32>
    %24 = vector.extract_strided_slice %7 {offsets = [0, 2], sizes = [64, 1], strides = [1, 1]} : vector<64x8xf32> to vector<64x1xf32>
    %25 = vector.extract_strided_slice %8 {offsets = [2, 0], sizes = [1, 64], strides = [1, 1]} : vector<8x64xf32> to vector<1x64xf32>
    %26 = vector.broadcast %24 : vector<64x1xf32> to vector<64x64xf32>
    %27 = vector.broadcast %25 : vector<1x64xf32> to vector<64x64xf32>
    %28 = arith.subf %26, %27 : vector<64x64xf32>
    %29 = arith.mulf %28, %28 : vector<64x64xf32>
    %30 = arith.addf %23, %29 : vector<64x64xf32>
    %31 = vector.broadcast %6 : vector<64x1xf32> to vector<64x64xf32>
    %32 = vector.broadcast %5 : vector<1x64xf32> to vector<64x64xf32>
    %33 = arith.cmpf oeq, %31, %32 : vector<64x64xf32>
    %cst_10 = arith.constant 1.600000e-01 : f32
    %34 = vector.broadcast %cst_10 : f32 to vector<64x64xf32>
    %35 = arith.cmpf olt, %30, %34 : vector<64x64xf32>
    %36 = arith.andi %33, %35 : vector<64x64xi1>
    %cst_11 = arith.constant 0.000000e+00 : f32
    %37 = vector.broadcast %cst_11 : f32 to vector<64x64xf32>
    %38 = arith.cmpf ogt, %30, %37 : vector<64x64xf32>
    %39 = arith.andi %36, %38 : vector<64x64xi1>
    %40 = arith.extui %39 : vector<64x64xi1> to vector<64x64xi32>
    %41 = arith.sitofp %40 : vector<64x64xi32> to vector<64x64xf32>
    %42 = vector.broadcast %4 : vector<1x64xf32> to vector<64x64xf32>
    %43 = arith.addf %30, %42 : vector<64x64xf32>
    %44 = tpu.reciprocal %43 {approx = true} : vector<64x64xf32> -> vector<64x64xf32>
    %45 = arith.mulf %43, %44 : vector<64x64xf32>
    %cst_12 = arith.constant 2.000000e+00 : f32
    %46 = vector.broadcast %cst_12 : f32 to vector<64x64xf32>
    %47 = arith.subf %46, %45 : vector<64x64xf32>
    %48 = arith.mulf %44, %47 : vector<64x64xf32>
    %49 = vector.broadcast %3 : vector<1x64xf32> to vector<64x64xf32>
    %50 = arith.mulf %49, %48 : vector<64x64xf32>
    %c0_13 = arith.constant 0 : index
    %c0_14 = arith.constant 0 : index
    %51 = vector.load %arg6[%c0_13, %c0_14] : memref<64x1xf32, #tpu.memory_space<vmem>>, vector<64x1xf32>
    %52 = arith.mulf %41, %50 : vector<64x64xf32>
    %cst_15 = arith.constant dense<0.000000e+00> : vector<64xf32>
    %53 = vector.multi_reduction <add>, %52, %cst_15 [1] : vector<64x64xf32> to vector<64xf32>
    %54 = vector.shape_cast %53 : vector<64xf32> to vector<64x1xf32>
    %55 = arith.addf %51, %54 : vector<64x1xf32>
    %c0_16 = arith.constant 0 : index
    %c0_17 = arith.constant 0 : index
    %56 = vector.load %arg6[%c0_16, %c0_17] : memref<64x1xf32, #tpu.memory_space<vmem>>, vector<64x1xf32>
    tpu.vector_store %arg6[%c0_16, %c0_17], %55 {strides = array<i32>} : memref<64x1xf32, #tpu.memory_space<vmem>>, vector<64x1xf32>,
    return
  }
  func.func @transform_0(%arg0: i32, %arg1: i32) -> (i32, i32) {
    %c0_i32 = arith.constant 0 : i32
    %c0_i32_0 = arith.constant 0 : i32
    return %arg0, %c0_i32 : i32, i32
  }
  func.func @transform_1(%arg0: i32, %arg1: i32) -> (i32, i32) {
    %c0_i32 = arith.constant 0 : i32
    %c0_i32_0 = arith.constant 0 : i32
    return %c0_i32, %arg1 : i32, i32
  }
  func.func @transform_2(%arg0: i32, %arg1: i32) -> (i32, i32) {
    %c0_i32 = arith.constant 0 : i32
    %c0_i32_0 = arith.constant 0 : i32
    return %c0_i32, %arg1 : i32, i32
  }
  func.func @transform_3(%arg0: i32, %arg1: i32) -> (i32, i32) {
    %c0_i32 = arith.constant 0 : i32
    %c0_i32_0 = arith.constant 0 : i32
    return %arg0, %c0_i32 : i32, i32
  }
  func.func @transform_4(%arg0: i32, %arg1: i32) -> (i32, i32) {
    %c0_i32 = arith.constant 0 : i32
    %c0_i32_0 = arith.constant 0 : i32
    return %arg0, %c0_i32 : i32, i32
  }
}

</mosaic_0001>

<llo_original>
// kernel: tpu_custom_call.1
$region0: #{tpu_custom_call.1}
  #allocation0 [shape = 'u32[]', space=smem, size = 0x4, offset = 0x4, fixed_abs, tag = 'smem constant byte address 0x4 - core index']
  #allocation1 [shape = 'u32[144,128]{1,0:T(1,128)}', space=vmem, size = 0x12000, scoped, tag = 'internal scratch']
  %s0 = inlined_call_operand.vmem [shape: f32[64,8], index: 0, kind: input, shape index: {}]
  %s1 = inlined_call_operand.vmem [shape: f32[8,64], index: 1, kind: input, shape index: {}]
  %s2 = inlined_call_operand.vmem [shape: f32[3,64], index: 2, kind: input, shape index: {}]
  %s3 = inlined_call_operand.vmem [shape: f32[64,1], index: 3, kind: input, shape index: {}]
  %s4 = inlined_call_operand.vmem [shape: f32[64,1], index: 4, kind: output, shape index: {}]
  %s5 = sld [smem:[#allocation0]]
  $region30: #{tpu_custom_call.1} parent=0
    _
  %s7 = ssub.s32 1, %s5
  %s8 = scalar_select 0, %s7, %s5
  // Predicated region
  $region2: #{tpu_custom_call.1} parent=0 // pred_check
    _
  $region3: #{tpu_custom_call.1} parent=0 // pred_check_branch
    %10 = sbr.rel (0) target = $region5
  $region4: #{tpu_custom_call.1} parent=0 // pred_region
    _
  $region5: #{tpu_custom_call.1} parent=0 // pred_fallthru
    _
  // Predicated region
  $region6: #{tpu_custom_call.1} parent=0 // pred_check
    _
  $region7: #{tpu_custom_call.1} parent=0 // pred_check_branch
    %12 = sbr.rel (0) target = $region9
  $region8: #{tpu_custom_call.1} parent=0 // pred_region
    _
  $region9: #{tpu_custom_call.1} parent=0 // pred_fallthru
    _
  // Predicated region
  $region10: #{tpu_custom_call.1} parent=0 // pred_check
    _
  $region11: #{tpu_custom_call.1} parent=0 // pred_check_branch
    %14 = sbr.rel (0) target = $region13
  $region12: #{tpu_custom_call.1} parent=0 // pred_region
    _
  $region13: #{tpu_custom_call.1} parent=0 // pred_fallthru
    _
  // Predicated region
  $region14: #{tpu_custom_call.1} parent=0 // pred_check
    _
  $region15: #{tpu_custom_call.1} parent=0 // pred_check_branch
    %16 = sbr.rel (0) target = $region17
  $region16: #{tpu_custom_call.1} parent=0 // pred_region
    _
  $region17: #{tpu_custom_call.1} parent=0 // pred_fallthru
    _
  %p17 = scmp.eq.s32.totalorder 0, 0
  // Predicated region
  $region18: #{tpu_custom_call.1} parent=0 // pred_check
    %p18 = pneg %p17
  $region19: #{tpu_custom_call.1} parent=0 // pred_check_branch
    %20 = sbr.rel (%p18) target = $region21
  $region20: #{tpu_custom_call.1} parent=0 // pred_region
    %vm21 = vcmask 7168
    %22 = vst.msk [vmem:[%s4] sm:$0xff] %vm21, 0.0
    %23 = vst.msk [vmem:[%s4 + $0x8] sm:$0xff] %vm21, 0.0
    %24 = vst.msk [vmem:[%s4 + $0x10] sm:$0xff] %vm21, 0.0
    %25 = vst.msk [vmem:[%s4 + $0x18] sm:$0xff] %vm21, 0.0
    %26 = vst.msk [vmem:[%s4 + $0x20] sm:$0xff] %vm21, 0.0
    %27 = vst.msk [vmem:[%s4 + $0x28] sm:$0xff] %vm21, 0.0
    %28 = vst.msk [vmem:[%s4 + $0x30] sm:$0xff] %vm21, 0.0
    %29 = vst.msk [vmem:[%s4 + $0x38] sm:$0xff] %vm21, 0.0
  $region21: #{tpu_custom_call.1} parent=0 // pred_fallthru
    _
  %v30 = vld [vmem:[%s2] sm:$0x1]
  %v31 = vld [vmem:[%s2 + $0x1] sm:$0x1]
  %v32 = vld [vmem:[%s2 + $0x2] sm:$0x1]
  %v33 = vld [vmem:[%s3] sm:$0xff]
  %v34 = vld [vmem:[%s3 + $0x8] sm:$0xff]
  %v35 = vld [vmem:[%s3 + $0x10] sm:$0xff]
  %v36 = vld [vmem:[%s3 + $0x18] sm:$0xff]
  %v37 = vld [vmem:[%s3 + $0x20] sm:$0xff]
  %v38 = vld [vmem:[%s3 + $0x28] sm:$0xff]
  %v39 = vld [vmem:[%s3 + $0x30] sm:$0xff]
  %v40 = vld [vmem:[%s3 + $0x38] sm:$0xff]
  %v41 = vld [vmem:[%s0] sm:$0xff]
  %v42 = vld [vmem:[%s0 + $0x8] sm:$0xff]
  %v43 = vld [vmem:[%s0 + $0x10] sm:$0xff]
  %v44 = vld [vmem:[%s0 + $0x18] sm:$0xff]
  %v45 = vld [vmem:[%s0 + $0x20] sm:$0xff]
  %v46 = vld [vmem:[%s0 + $0x28] sm:$0xff]
  %v47 = vld [vmem:[%s0 + $0x30] sm:$0xff]
  %v48 = vld [vmem:[%s0 + $0x38] sm:$0xff]
  %v49 = vld [vmem:[%s1] sm:$0xff]
  %51 = vset.pattern.permute.xlu0 0
  %52 = vperm.xlu0 %51, %v41
  %v53 = vpop.permute.xlu0 %52
  %56 = vset.pattern.permute.xlu0 0
  %57 = vperm.xlu0 %56, %v42
  %v58 = vpop.permute.xlu0 %57
  %61 = vset.pattern.permute.xlu0 0
  %62 = vperm.xlu0 %61, %v43
  %v63 = vpop.permute.xlu0 %62
  %66 = vset.pattern.permute.xlu0 0
  %67 = vperm.xlu0 %66, %v44
  %v68 = vpop.permute.xlu0 %67
  %71 = vset.pattern.permute.xlu0 0
  %72 = vperm.xlu0 %71, %v45
  %v73 = vpop.permute.xlu0 %72
  %76 = vset.pattern.permute.xlu0 0
  %77 = vperm.xlu0 %76, %v46
  %v78 = vpop.permute.xlu0 %77
  %81 = vset.pattern.permute.xlu0 0
  %82 = vperm.xlu0 %81, %v47
  %v83 = vpop.permute.xlu0 %82
  %86 = vset.pattern.permute.xlu0 0
  %87 = vperm.xlu0 %86, %v48
  %v88 = vpop.permute.xlu0 %87
  %v90 = vlaneseq
  %v91 = vshrl.u32 %v90, 7
  %v92 = vsub.s32 0, %v91
  %v93 = vrot.slane %v49, %v92
  %v94 = vsub.f32 %v53, %v93
  %v95 = vsub.f32 %v58, %v93
  %v96 = vsub.f32 %v63, %v93
  %v97 = vsub.f32 %v68, %v93
  %v98 = vsub.f32 %v73, %v93
  %v99 = vsub.f32 %v78, %v93
  %v100 = vsub.f32 %v83, %v93
  %v101 = vsub.f32 %v88, %v93
  %v102 = vmul.f32 %v94, %v94
  %v103 = vmul.f32 %v95, %v95
  %v104 = vmul.f32 %v96, %v96
  %v105 = vmul.f32 %v97, %v97
  %v106 = vmul.f32 %v98, %v98
  %v107 = vmul.f32 %v99, %v99
  %v108 = vmul.f32 %v100, %v100
  %v109 = vmul.f32 %v101, %v101
  %v110 = vadd.f32 %v102, 0.0
  %v111 = vadd.f32 %v103, 0.0
  %v112 = vadd.f32 %v104, 0.0
  %v113 = vadd.f32 %v105, 0.0
  %v114 = vadd.f32 %v106, 0.0
  %v115 = vadd.f32 %v107, 0.0
  %v116 = vadd.f32 %v108, 0.0
  %v117 = vadd.f32 %v109, 0.0
  %118 = vset.pattern.permute.xlu0 1
  %119 = vperm.xlu0 %118, %v41
  %v120 = vpop.permute.xlu0 %119
  %122 = vset.pattern.permute.xlu0 1
  %123 = vperm.xlu0 %122, %v42
  %v124 = vpop.permute.xlu0 %123
  %126 = vset.pattern.permute.xlu0 1
  %127 = vperm.xlu0 %126, %v43
  %v128 = vpop.permute.xlu0 %127
  %130 = vset.pattern.permute.xlu0 1
  %131 = vperm.xlu0 %130, %v44
  %v132 = vpop.permute.xlu0 %131
  %134 = vset.pattern.permute.xlu0 1
  %135 = vperm.xlu0 %134, %v45
  %v136 = vpop.permute.xlu0 %135
  %138 = vset.pattern.permute.xlu0 1
  %139 = vperm.xlu0 %138, %v46
  %v140 = vpop.permute.xlu0 %139
  %142 = vset.pattern.permute.xlu0 1
  %143 = vperm.xlu0 %142, %v47
  %v144 = vpop.permute.xlu0 %143
  %146 = vset.pattern.permute.xlu0 1
  %147 = vperm.xlu0 %146, %v48
  %v148 = vpop.permute.xlu0 %147
  %v150 = vlaneseq
  %v151 = vshrl.u32 %v150, 7
  %v152 = vsub.s32 1, %v151
  %v153 = vrot.slane %v49, %v152
  %v154 = vsub.f32 %v120, %v153
  %v155 = vsub.f32 %v124, %v153
  %v156 = vsub.f32 %v128, %v153
  %v157 = vsub.f32 %v132, %v153
  %v158 = vsub.f32 %v136, %v153
  %v159 = vsub.f32 %v140, %v153
  %v160 = vsub.f32 %v144, %v153
  %v161 = vsub.f32 %v148, %v153
  %v162 = vmul.f32 %v154, %v154
  %v163 = vmul.f32 %v155, %v155
  %v164 = vmul.f32 %v156, %v156
  %v165 = vmul.f32 %v157, %v157
  %v166 = vmul.f32 %v158, %v158
  %v167 = vmul.f32 %v159, %v159
  %v168 = vmul.f32 %v160, %v160
  %v169 = vmul.f32 %v161, %v161
  %v170 = vadd.f32 %v110, %v162
  %v171 = vadd.f32 %v111, %v163
  %v172 = vadd.f32 %v112, %v164
  %v173 = vadd.f32 %v113, %v165
  %v174 = vadd.f32 %v114, %v166
  %v175 = vadd.f32 %v115, %v167
  %v176 = vadd.f32 %v116, %v168
  %v177 = vadd.f32 %v117, %v169
  %178 = vset.pattern.permute.xlu0 2
  %179 = vperm.xlu0 %178, %v41
  %v180 = vpop.permute.xlu0 %179
  %182 = vset.pattern.permute.xlu0 2
  %183 = vperm.xlu0 %182, %v42
  %v184 = vpop.permute.xlu0 %183
  %186 = vset.pattern.permute.xlu0 2
  %187 = vperm.xlu0 %186, %v43
  %v188 = vpop.permute.xlu0 %187
  %190 = vset.pattern.permute.xlu0 2
  %191 = vperm.xlu0 %190, %v44
  %v192 = vpop.permute.xlu0 %191
  %194 = vset.pattern.permute.xlu0 2
  %195 = vperm.xlu0 %194, %v45
  %v196 = vpop.permute.xlu0 %195
  %198 = vset.pattern.permute.xlu0 2
  %199 = vperm.xlu0 %198, %v46
  %v200 = vpop.permute.xlu0 %199
  %202 = vset.pattern.permute.xlu0 2
  %203 = vperm.xlu0 %202, %v47
  %v204 = vpop.permute.xlu0 %203
  %206 = vset.pattern.permute.xlu0 2
  %207 = vperm.xlu0 %206, %v48
  %v208 = vpop.permute.xlu0 %207
  %v210 = vlaneseq
  %v211 = vshrl.u32 %v210, 7
  %v212 = vsub.s32 2, %v211
  %v213 = vrot.slane %v49, %v212
  %v214 = vsub.f32 %v180, %v213
  %v215 = vsub.f32 %v184, %v213
  %v216 = vsub.f32 %v188, %v213
  %v217 = vsub.f32 %v192, %v213
  %v218 = vsub.f32 %v196, %v213
  %v219 = vsub.f32 %v200, %v213
  %v220 = vsub.f32 %v204, %v213
  %v221 = vsub.f32 %v208, %v213
  %v222 = vmul.f32 %v214, %v214
  %v223 = vmul.f32 %v215, %v215
  %v224 = vmul.f32 %v216, %v216
  %v225 = vmul.f32 %v217, %v217
  %v226 = vmul.f32 %v218, %v218
  %v227 = vmul.f32 %v219, %v219
  %v228 = vmul.f32 %v220, %v220
  %v229 = vmul.f32 %v221, %v221
  %v230 = vadd.f32 %v170, %v222
  %v231 = vadd.f32 %v171, %v223
  %v232 = vadd.f32 %v172, %v224
  %v233 = vadd.f32 %v173, %v225
  %v234 = vadd.f32 %v174, %v226
  %v235 = vadd.f32 %v175, %v227
  %v236 = vadd.f32 %v176, %v228
  %v237 = vadd.f32 %v177, %v229
  %239 = vset.pattern.permute.xlu0 0
  %240 = vperm.xlu0 %239, %v33
  %v241 = vpop.permute.xlu0 %240
  %244 = vset.pattern.permute.xlu0 0
  %245 = vperm.xlu0 %244, %v34
  %v246 = vpop.permute.xlu0 %245
  %249 = vset.pattern.permute.xlu0 0
  %250 = vperm.xlu0 %249, %v35
  %v251 = vpop.permute.xlu0 %250
  %254 = vset.pattern.permute.xlu0 0
  %255 = vperm.xlu0 %254, %v36
  %v256 = vpop.permute.xlu0 %255
  %259 = vset.pattern.permute.xlu0 0
  %260 = vperm.xlu0 %259, %v37
  %v261 = vpop.permute.xlu0 %260
  %264 = vset.pattern.permute.xlu0 0
  %265 = vperm.xlu0 %264, %v38
  %v266 = vpop.permute.xlu0 %265
  %269 = vset.pattern.permute.xlu0 0
  %270 = vperm.xlu0 %269, %v39
  %v271 = vpop.permute.xlu0 %270
  %274 = vset.pattern.permute.xlu0 0
  %275 = vperm.xlu0 %274, %v40
  %v276 = vpop.permute.xlu0 %275
  %v278 = vlaneseq
  %v279 = vshrl.u32 %v278, 7
  %v280 = vsub.s32 0, %v279
  %v281 = vrot.slane %v32, %v280
  %vm282 = vcmp.eq.f32.partialorder %v241, %v281
  %vm283 = vcmp.eq.f32.partialorder %v246, %v281
  %vm284 = vcmp.eq.f32.partialorder %v251, %v281
  %vm285 = vcmp.eq.f32.partialorder %v256, %v281
  %vm286 = vcmp.eq.f32.partialorder %v261, %v281
  %vm287 = vcmp.eq.f32.partialorder %v266, %v281
  %vm288 = vcmp.eq.f32.partialorder %v271, %v281
  %vm289 = vcmp.eq.f32.partialorder %v276, %v281
  %vm290 = vcmp.lt.f32.partialorder %v230, 0.16
  %vm291 = vcmp.lt.f32.partialorder %v231, 0.16
  %vm292 = vcmp.lt.f32.partialorder %v232, 0.16
  %vm293 = vcmp.lt.f32.partialorder %v233, 0.16
  %vm294 = vcmp.lt.f32.partialorder %v234, 0.16
  %vm295 = vcmp.lt.f32.partialorder %v235, 0.16
  %vm296 = vcmp.lt.f32.partialorder %v236, 0.16
  %vm297 = vcmp.lt.f32.partialorder %v237, 0.16
  %vm298 = vmand %vm282, %vm290
  %vm299 = vmand %vm283, %vm291
  %vm300 = vmand %vm284, %vm292
  %vm301 = vmand %vm285, %vm293
  %vm302 = vmand %vm286, %vm294
  %vm303 = vmand %vm287, %vm295
  %vm304 = vmand %vm288, %vm296
  %vm305 = vmand %vm289, %vm297
  %vm306 = vcmp.gt.f32.partialorder %v230, 0.0
  %vm307 = vcmp.gt.f32.partialorder %v231, 0.0
  %vm308 = vcmp.gt.f32.partialorder %v232, 0.0
  %vm309 = vcmp.gt.f32.partialorder %v233, 0.0
  %vm310 = vcmp.gt.f32.partialorder %v234, 0.0
  %vm311 = vcmp.gt.f32.partialorder %v235, 0.0
  %vm312 = vcmp.gt.f32.partialorder %v236, 0.0
  %vm313 = vcmp.gt.f32.partialorder %v237, 0.0
  %vm314 = vmand %vm298, %vm306
  %vm315 = vmand %vm299, %vm307
  %vm316 = vmand %vm300, %vm308
  %vm317 = vmand %vm301, %vm309
  %vm318 = vmand %vm302, %vm310
  %vm319 = vmand %vm303, %vm311
  %vm320 = vmand %vm304, %vm312
  %vm321 = vmand %vm305, %vm313
  %v322 = vsel %vm314, 1, 0
  %v323 = vsel %vm315, 1, 0
  %v324 = vsel %vm316, 1, 0
  %v325 = vsel %vm317, 1, 0
  %v326 = vsel %vm318, 1, 0
  %v327 = vsel %vm319, 1, 0
  %v328 = vsel %vm320, 1, 0
  %v329 = vsel %vm321, 1, 0
  %v330 = vcvt.s32.f32 %v322
  %v331 = vcvt.s32.f32 %v323
  %v332 = vcvt.s32.f32 %v324
  %v333 = vcvt.s32.f32 %v325
  %v334 = vcvt.s32.f32 %v326
  %v335 = vcvt.s32.f32 %v327
  %v336 = vcvt.s32.f32 %v328
  %v337 = vcvt.s32.f32 %v329
  %v338 = vlaneseq
  %v339 = vshrl.u32 %v338, 7
  %v340 = vsub.s32 0, %v339
  %v341 = vrot.slane %v31, %v340
  %v342 = vadd.f32 %v230, %v341
  %v343 = vadd.f32 %v231, %v341
  %v344 = vadd.f32 %v232, %v341
  %v345 = vadd.f32 %v233, %v341
  %v346 = vadd.f32 %v234, %v341
  %v347 = vadd.f32 %v235, %v341
  %v348 = vadd.f32 %v236, %v341
  %v349 = vadd.f32 %v237, %v341
  %v350 = vrcp.pop %v342
  %v351 = vrcp.pop %v343
  %v352 = vrcp.pop %v344
  %v353 = vrcp.pop %v345
  %v354 = vrcp.pop %v346
  %v355 = vrcp.pop %v347
  %v356 = vrcp.pop %v348
  %v357 = vrcp.pop %v349
  %v358 = vmul.f32 %v342, %v350
  %v359 = vmul.f32 %v343, %v351
  %v360 = vmul.f32 %v344, %v352
  %v361 = vmul.f32 %v345, %v353
  %v362 = vmul.f32 %v346, %v354
  %v363 = vmul.f32 %v347, %v355
  %v364 = vmul.f32 %v348, %v356
  %v365 = vmul.f32 %v349, %v357
  %v366 = vsub.f32 2.0, %v358
  %v367 = vsub.f32 2.0, %v359
  %v368 = vsub.f32 2.0, %v360
  %v369 = vsub.f32 2.0, %v361
  %v370 = vsub.f32 2.0, %v362
  %v371 = vsub.f32 2.0, %v363
  %v372 = vsub.f32 2.0, %v364
  %v373 = vsub.f32 2.0, %v365
  %v374 = vmul.f32 %v350, %v366
  %v375 = vmul.f32 %v351, %v367
  %v376 = vmul.f32 %v352, %v368
  %v377 = vmul.f32 %v353, %v369
  %v378 = vmul.f32 %v354, %v370
  %v379 = vmul.f32 %v355, %v371
  %v380 = vmul.f32 %v356, %v372
  %v381 = vmul.f32 %v357, %v373
  %v382 = vlaneseq
  %v383 = vshrl.u32 %v382, 7
  %v384 = vsub.s32 0, %v383
  %v385 = vrot.slane %v30, %v384
  %v386 = vmul.f32 %v385, %v374
  %v387 = vmul.f32 %v385, %v375
  %v388 = vmul.f32 %v385, %v376
  %v389 = vmul.f32 %v385, %v377
  %v390 = vmul.f32 %v385, %v378
  %v391 = vmul.f32 %v385, %v379
  %v392 = vmul.f32 %v385, %v380
  %v393 = vmul.f32 %v385, %v381
  %v394 = vld [vmem:[%s4] sm:$0xff]
  %v395 = vld [vmem:[%s4 + $0x8] sm:$0xff]
  %v396 = vld [vmem:[%s4 + $0x10] sm:$0xff]
  %v397 = vld [vmem:[%s4 + $0x18] sm:$0xff]
  %v398 = vld [vmem:[%s4 + $0x20] sm:$0xff]
  %v399 = vld [vmem:[%s4 + $0x28] sm:$0xff]
  %v400 = vld [vmem:[%s4 + $0x30] sm:$0xff]
  %v401 = vld [vmem:[%s4 + $0x38] sm:$0xff]
  %v402 = vmul.f32 %v330, %v386
  %v403 = vmul.f32 %v331, %v387
  %v404 = vmul.f32 %v332, %v388
  %v405 = vmul.f32 %v333, %v389
  %v406 = vmul.f32 %v334, %v390
  %v407 = vmul.f32 %v335, %v391
  %v408 = vmul.f32 %v336, %v392
  %v409 = vmul.f32 %v337, %v393
  %vm410 = vcmask 523264
  %v411 = vsel %vm410, %v402, 0.0
  %412 = vadd.xlane.f32.xlu0 %v411
  %v413 = vpop.xlane.xlu0 %412
  %v414 = vsel %vm410, %v403, 0.0
  %415 = vadd.xlane.f32.xlu0 %v414
  %v416 = vpop.xlane.xlu0 %415
  %v417 = vsel %vm410, %v404, 0.0
  %418 = vadd.xlane.f32.xlu0 %v417
  %v419 = vpop.xlane.xlu0 %418
  %v420 = vsel %vm410, %v405, 0.0
  %421 = vadd.xlane.f32.xlu0 %v420
  %v422 = vpop.xlane.xlu0 %421
  %v423 = vsel %vm410, %v406, 0.0
  %424 = vadd.xlane.f32.xlu0 %v423
  %v425 = vpop.xlane.xlu0 %424
  %v426 = vsel %vm410, %v407, 0.0
  %427 = vadd.xlane.f32.xlu0 %v426
  %v428 = vpop.xlane.xlu0 %427
  %v429 = vsel %vm410, %v408, 0.0
  %430 = vadd.xlane.f32.xlu0 %v429
  %v431 = vpop.xlane.xlu0 %430
  %v432 = vsel %vm410, %v409, 0.0
  %433 = vadd.xlane.f32.xlu0 %v432
  %v434 = vpop.xlane.xlu0 %433
  %v435 = vadd.f32 %v394, %v413
  %v436 = vadd.f32 %v395, %v416
  %v437 = vadd.f32 %v396, %v419
  %v438 = vadd.f32 %v397, %v422
  %v439 = vadd.f32 %v398, %v425
  %v440 = vadd.f32 %v399, %v428
  %v441 = vadd.f32 %v400, %v431
  %v442 = vadd.f32 %v401, %v434
  %vm443 = vcmask 7168
  %444 = vst.msk [vmem:[%s4] sm:$0xff] %vm443, %v435
  %445 = vst.msk [vmem:[%s4 + $0x8] sm:$0xff] %vm443, %v436
  %446 = vst.msk [vmem:[%s4 + $0x10] sm:$0xff] %vm443, %v437
  %447 = vst.msk [vmem:[%s4 + $0x18] sm:$0xff] %vm443, %v438
  %448 = vst.msk [vmem:[%s4 + $0x20] sm:$0xff] %vm443, %v439
  %449 = vst.msk [vmem:[%s4 + $0x28] sm:$0xff] %vm443, %v440
  %450 = vst.msk [vmem:[%s4 + $0x30] sm:$0xff] %vm443, %v441
  %451 = vst.msk [vmem:[%s4 + $0x38] sm:$0xff] %vm443, %v442
  // Predicated region
  $region22: #{tpu_custom_call.1} parent=0 // pred_check
    _
  $region23: #{tpu_custom_call.1} parent=0 // pred_check_branch
    %453 = sbr.rel (0) target = $region25
  $region24: #{tpu_custom_call.1} parent=0 // pred_region
    _
  $region25: #{tpu_custom_call.1} parent=0 // pred_fallthru
    _
  // Predicated region
  $region26: #{tpu_custom_call.1} parent=0 // pred_check
    _
  $region27: #{tpu_custom_call.1} parent=0 // pred_check_branch
    %455 = sbr.rel (0) target = $region29
  $region28: #{tpu_custom_call.1} parent=0 // pred_region
    _
  $region29: #{tpu_custom_call.1} parent=0 // pred_fallthru
    _

</llo_original>
